<compile_context>
chip_gen: v7x
topology: tpu7x:2x2x1
jax: 0.10.0
libtpu: 0.0.40
codegen_flags: <defaults>
</compile_context>

<pallas_src>
import functools

import jax
import jax.numpy as jnp
from jax.experimental import pallas as pl
from jax.experimental.pallas import tpu as pltpu


# ----------------------------------------------------------------------------
# Kernel: bidirectional LSTM recurrence (+ optional fused Linear head),
#         time-major [T, Bt, *] inside the kernel, one batch tile per grid step.
# ----------------------------------------------------------------------------
def _make_bilstm_kernel(hidden_size, with_linear, compute_dtype):
    H = hidden_size

    def kernel(*refs):
        if with_linear:
            (x_ref, wih_f, whh_f, b_f, wih_b, whh_b, b_b,
             w_lin, b_lin, out_ref, gxf, gxb, rec) = refs
        else:
            (x_ref, wih_f, whh_f, b_f, wih_b, whh_b, b_b,
             out_ref, gxf, gxb) = refs
            rec = out_ref   # hidden states go straight into the output tile

        T, Bt, D = x_ref.shape

        # ---- input pre-projection: one big MXU matmul per direction into VMEM scratch
        x2 = x_ref[...].reshape(T * Bt, D).astype(compute_dtype)
        gxf[...] = (jnp.dot(x2, wih_f[...].astype(compute_dtype),
                            preferred_element_type=jnp.float32)
                    + b_f[...]).reshape(T, Bt, 4 * H).astype(gxf.dtype)
        gxb[...] = (jnp.dot(x2, wih_b[...].astype(compute_dtype),
                            preferred_element_type=jnp.float32)
                    + b_b[...]).reshape(T, Bt, 4 * H).astype(gxb.dtype)

        # hoisted out of the time loop (JAX does not CSE broadcasts/casts)
        whhf = whh_f[...].astype(compute_dtype)
        whhb = whh_b[...].astype(compute_dtype)

        def cell(gates, c):
            i = jax.nn.sigmoid(gates[:, 0 * H:1 * H])
            f = jax.nn.sigmoid(gates[:, 1 * H:2 * H])
            g = jnp.tanh(gates[:, 2 * H:3 * H])
            o = jax.nn.sigmoid(gates[:, 3 * H:4 * H])
            c_new = f * c + i * g
            h_new = o * jnp.tanh(c_new)
            return h_new, c_new

        def step(t, carry):
            h_f, c_f, h_b, c_b = carry
            # forward direction: time t  -> lanes [0:H]
            gf = gxf[t] + jnp.dot(h_f.astype(compute_dtype), whhf,
                                  preferred_element_type=jnp.float32)
            h_f, c_f = cell(gf, c_f)
            rec[t, :, 0:H] = h_f.astype(rec.dtype)
            # backward direction: time T-1-t -> lanes [H:2H]
            tb = T - 1 - t
            gb = gxb[tb] + jnp.dot(h_b.astype(compute_dtype), whhb,
                                   preferred_element_type=jnp.float32)
            h_b, c_b = cell(gb, c_b)
            rec[tb, :, H:2 * H] = h_b.astype(rec.dtype)
            return h_f, c_f, h_b, c_b

        z = jnp.zeros((Bt, H), jnp.float32)
        jax.lax.fori_loop(0, T, step, (z, z, z, z))

        # ---- fused Linear(2H -> O) epilogue: no HBM round trip for `recurrent`
        if with_linear:
            O = out_ref.shape[-1]
            r = rec[...].reshape(T * Bt, 2 * H).astype(compute_dtype)
            out_ref[...] = (jnp.dot(r, w_lin[...].astype(compute_dtype),
                                    preferred_element_type=jnp.float32)
                            + b_lin[...]).reshape(T, Bt, O).astype(out_ref.dtype)

    return kernel


# ----------------------------------------------------------------------------
# Wrapper
# ----------------------------------------------------------------------------
@functools.partial(jax.jit,
                   static_argnames=("with_linear", "compute_dtype", "batch_tile"))
def bidirectional_lstm(x, params, with_linear=True, compute_dtype=jnp.float32,
                       batch_tile=64):
    """x: [B, T, D] batch-first. Returns [B, T, 2H] (no linear) or [B, T, O]."""
    B, T, D = x.shape
    H = params["whh_f"].shape[0]
    C = params["w_lin"].shape[1] if with_linear else 2 * H

    # Time-major inside the kernel so the serial recurrence indexes the leading axis.
    xt = jnp.transpose(x, (1, 0, 2))                       # [T, B, D]

    bt = B if B <= batch_tile else batch_tile
    if bt != B and bt % 8 != 0:
        raise ValueError("batch_tile must be a multiple of 8")
    nb = pl.cdiv(B, bt)

    kernel = _make_bilstm_kernel(H, with_linear, compute_dtype)

    def _full(shape):
        return pl.BlockSpec(shape, lambda i: (0,) * len(shape))

    in_specs = [
        pl.BlockSpec((T, bt, D), lambda i: (0, i, 0)),     # batch-tiled input
        _full((D, 4 * H)), _full((H, 4 * H)), _full((1, 4 * H)),   # fwd weights
        _full((D, 4 * H)), _full((H, 4 * H)), _full((1, 4 * H)),   # bwd weights
    ]
    args = [xt, params["wih_f"], params["whh_f"], params["b_f"],
            params["wih_b"], params["whh_b"], params["b_b"]]
    if with_linear:
        in_specs += [_full((2 * H, C)), _full((1, C))]
        args += [params["w_lin"], params["b_lin"]]

    scratch = [pltpu.VMEM((T, bt, 4 * H), compute_dtype),  # gx_f
               pltpu.VMEM((T, bt, 4 * H), compute_dtype)]  # gx_b
    if with_linear:
        scratch.append(pltpu.VMEM((T, bt, 2 * H), jnp.float32))  # combined recurrent buf

    # Advisory cost hint: 2 dirs x (input + recurrent) matmuls + optional linear head.
    flops = 4 * B * T * (D + H) * 4 * H + (2 * B * T * 2 * H * C if with_linear else 0)
    transcendentals = 2 * B * T * 5 * H
    bytes_accessed = 4 * (B * T * D + B * T * C
                          + 2 * (D * 4 * H + H * 4 * H + 4 * H)
                          + (2 * H * C + C if with_linear else 0))

    out_tm = pl.pallas_call(
        kernel,
        grid=(nb,),
        in_specs=in_specs,
        out_specs=pl.BlockSpec((T, bt, C), lambda i: (0, i, 0)),
        out_shape=jax.ShapeDtypeStruct((T, B, C), jnp.float32),
        scratch_shapes=scratch,
        compiler_params=pltpu.CompilerParams(
            dimension_semantics=("parallel",),
            vmem_limit_bytes=48 * 1024 * 1024),
        cost_estimate=pl.CostEstimate(flops=flops,
                                      transcendentals=transcendentals,
                                      bytes_accessed=bytes_accessed),
    )(*args)

    return jnp.transpose(out_tm, (1, 0, 2))                # batch-first [B, T, C]


# ----------------------------------------------------------------------------
# Deterministic parameter init (shapes follow nn.LSTM / nn.Linear; independent keys)
# ----------------------------------------------------------------------------
def init_params(key, input_size, hidden_size, output_size):
    D, H, O = input_size, hidden_size, output_size
    k = 1.0 / jnp.sqrt(jnp.float32(H))
    keys = jax.random.split(key, 10)

    def u(kk, shape):
        return jax.random.uniform(kk, shape, jnp.float32, -k, k)

    return {
        # stored transposed so the kernel computes x @ W directly
        "wih_f": u(keys[0], (D, 4 * H)),
        "whh_f": u(keys[1], (H, 4 * H)),
        "b_f":   u(keys[2], (1, 4 * H)) + u(keys[3], (1, 4 * H)),   # b_ih + b_hh
        "wih_b": u(keys[4], (D, 4 * H)),
        "whh_b": u(keys[5], (H, 4 * H)),
        "b_b":   u(keys[6], (1, 4 * H)) + u(keys[7], (1, 4 * H)),
        "w_lin": u(keys[8], (2 * H, O)),
        "b_lin": u(keys[9], (1, O)),
    }


# ----------------------------------------------------------------------------
# Pure-JAX reference (sanity check only)
# ----------------------------------------------------------------------------
def _ref_bilstm(x, p, with_linear=True):
    B, T, D = x.shape
    H = p["whh_f"].shape[0]

    def run_dir(wih, whh, b, reverse):
        xs = jnp.transpose(x, (1, 0, 2))
        if reverse:
            xs = xs[::-1]

        def step(carry, xt):
            h, c = carry
            gates = xt @ wih + h @ whh + b
            i = jax.nn.sigmoid(gates[:, 0 * H:1 * H])
            f = jax.nn.sigmoid(gates[:, 1 * H:2 * H])
            g = jnp.tanh(gates[:, 2 * H:3 * H])
            o = jax.nn.sigmoid(gates[:, 3 * H:4 * H])
            c = f * c + i * g
            h = o * jnp.tanh(c)
            return (h, c), h

        z = jnp.zeros((B, H), jnp.float32)
        _, hs = jax.lax.scan(step, (z, z), xs)
        if reverse:
            hs = hs[::-1]
        return jnp.transpose(hs, (1, 0, 2))

    rec = jnp.concatenate([
        run_dir(p["wih_f"], p["whh_f"], p["b_f"], False),
        run_dir(p["wih_b"], p["whh_b"], p["b_b"], True),
    ], axis=-1)
    if not with_linear:
        return rec
    return rec @ p["w_lin"] + p["b_lin"]


if __name__ == "__main__":
    B, T, D, H, O = 2, 8, 16, 32, 64

    key = jax.random.PRNGKey(0)
    kx, kp = jax.random.split(key)
    x = jax.random.normal(kx, (B, T, D), jnp.float32)
    params = init_params(kp, D, H, O)

    # --- with fused linear head (f32 compute) ---
    out = bidirectional_lstm(x, params, with_linear=True)
    out = jax.block_until_ready(out)
    assert out.shape == (B, T, O), out.shape
    ref = _ref_bilstm(x, params, with_linear=True)
    assert jnp.allclose(out, ref, rtol=1e-2, atol=1e-2), \
        float(jnp.max(jnp.abs(out - ref)))

    # --- recurrent-only output (module default with_linear=False) ---
    rec = bidirectional_lstm(x, params, with_linear=False)
    rec = jax.block_until_ready(rec)
    assert rec.shape == (B, T, 2 * H), rec.shape
    ref_rec = _ref_bilstm(x, params, with_linear=False)
    assert jnp.allclose(rec, ref_rec, rtol=1e-2, atol=1e-2), \
        float(jnp.max(jnp.abs(rec - ref_rec)))

    # --- bf16 MXU path (recommended on v6e/v7x): smoke test ---
    out_bf16 = bidirectional_lstm(x, params, with_linear=True,
                                  compute_dtype=jnp.bfloat16)
    out_bf16 = jax.block_until_ready(out_bf16)
    assert out_bf16.shape == (B, T, O)
    assert bool(jnp.all(jnp.isfinite(out_bf16)))

    print("KERNEL_OK")
</pallas_src>

<mosaic_0001>
module attributes {stable_mosaic.version = 11 : i64} {
  func.func @kernel(%arg0: i32, %arg1: memref<8x2x16xf32, #tpu.memory_space<vmem>>, %arg2: memref<16x128xf32, #tpu.memory_space<vmem>>, %arg3: memref<32x128xf32, #tpu.memory_space<vmem>>, %arg4: memref<1x128xf32, #tpu.memory_space<vmem>>, %arg5: memref<16x128xf32, #tpu.memory_space<vmem>>, %arg6: memref<32x128xf32, #tpu.memory_space<vmem>>, %arg7: memref<1x128xf32, #tpu.memory_space<vmem>>, %arg8: memref<64x64xf32, #tpu.memory_space<vmem>>, %arg9: memref<1x64xf32, #tpu.memory_space<vmem>>, %arg10: memref<8x2x64xf32, #tpu.memory_space<vmem>>, %arg11: memref<8x2x128xf32, #tpu.memory_space<vmem>>, %arg12: memref<8x2x128xf32, #tpu.memory_space<vmem>>, %arg13: memref<8x2x64xf32, #tpu.memory_space<vmem>>) attributes {dimension_semantics = [#tpu.dimension_semantics<parallel>], iteration_bounds = array<i64: 1>, scalar_prefetch = 0 : i64, scratch_operands = 3 : i64, tpu.core_type = #tpu.core_type<tc>, window_params = [{transform_indices = @transform_0, window_bounds = array<i64: 8, 2, 16>}, {pipeline_mode = #tpu.pipeline_mode<synchronous>, transform_indices = @transform_1, window_bounds = array<i64: 16, 128>}, {pipeline_mode = #tpu.pipeline_mode<synchronous>, transform_indices = @transform_2, window_bounds = array<i64: 32, 128>}, {pipeline_mode = #tpu.pipeline_mode<synchronous>, transform_indices = @transform_3, window_bounds = array<i64: 1, 128>}, {pipeline_mode = #tpu.pipeline_mode<synchronous>, transform_indices = @transform_4, window_bounds = array<i64: 16, 128>}, {pipeline_mode = #tpu.pipeline_mode<synchronous>, transform_indices = @transform_5, window_bounds = array<i64: 32, 128>}, {pipeline_mode = #tpu.pipeline_mode<synchronous>, transform_indices = @transform_6, window_bounds = array<i64: 1, 128>}, {pipeline_mode = #tpu.pipeline_mode<synchronous>, transform_indices = @transform_7, window_bounds = array<i64: 64, 64>}, {pipeline_mode = #tpu.pipeline_mode<synchronous>, transform_indices = @transform_8, window_bounds = array<i64: 1, 64>}, {transform_indices = @transform_9, window_bounds = array<i64: 8, 2, 64>}]} {
    %c0 = arith.constant 0 : index
    %c0_0 = arith.constant 0 : index
    %c0_1 = arith.constant 0 : index
    %0 = vector.load %arg1[%c0, %c0_0, %c0_1] : memref<8x2x16xf32, #tpu.memory_space<vmem>>, vector<8x2x16xf32>
    %1 = vector.shape_cast %0 : vector<8x2x16xf32> to vector<16x16xf32>
    %c0_2 = arith.constant 0 : index
    %c0_3 = arith.constant 0 : index
    %2 = vector.load %arg2[%c0_2, %c0_3] : memref<16x128xf32, #tpu.memory_space<vmem>>, vector<16x128xf32>
    %cst = arith.constant dense<0.000000e+00> : vector<16x128xf32>
    %3 = tpu.matmul %1, %2, %cst {dimension_numbers = #tpu.dot_dimension_numbers<[1], [0], [0], [1], [0, 0, 1, 1], [], []>} : vector<16x16xf32>, vector<16x128xf32>, vector<16x128xf32> -> vector<16x128xf32>
    %c0_4 = arith.constant 0 : index
    %c0_5 = arith.constant 0 : index
    %4 = vector.load %arg4[%c0_4, %c0_5] : memref<1x128xf32, #tpu.memory_space<vmem>>, vector<1x128xf32>
    %5 = vector.broadcast %4 : vector<1x128xf32> to vector<16x128xf32>
    %6 = arith.addf %3, %5 : vector<16x128xf32>
    %7 = vector.shape_cast %6 : vector<16x128xf32> to vector<8x2x128xf32>
    %c0_6 = arith.constant 0 : index
    %c0_7 = arith.constant 0 : index
    %c0_8 = arith.constant 0 : index
    %8 = vector.load %arg11[%c0_6, %c0_7, %c0_8] : memref<8x2x128xf32, #tpu.memory_space<vmem>>, vector<8x2x128xf32>
    tpu.vector_store %arg11[%c0_6, %c0_7, %c0_8], %7 {strides = array<i32>} : memref<8x2x128xf32, #tpu.memory_space<vmem>>, vector<8x2x128xf32>,
    %c0_9 = arith.constant 0 : index
    %c0_10 = arith.constant 0 : index
    %9 = vector.load %arg5[%c0_9, %c0_10] : memref<16x128xf32, #tpu.memory_space<vmem>>, vector<16x128xf32>
    %cst_11 = arith.constant dense<0.000000e+00> : vector<16x128xf32>
    %10 = tpu.matmul %1, %9, %cst_11 {dimension_numbers = #tpu.dot_dimension_numbers<[1], [0], [0], [1], [0, 0, 1, 1], [], []>} : vector<16x16xf32>, vector<16x128xf32>, vector<16x128xf32> -> vector<16x128xf32>
    %c0_12 = arith.constant 0 : index
    %c0_13 = arith.constant 0 : index
    %11 = vector.load %arg7[%c0_12, %c0_13] : memref<1x128xf32, #tpu.memory_space<vmem>>, vector<1x128xf32>
    %12 = vector.broadcast %11 : vector<1x128xf32> to vector<16x128xf32>
    %13 = arith.addf %10, %12 : vector<16x128xf32>
    %14 = vector.shape_cast %13 : vector<16x128xf32> to vector<8x2x128xf32>
    %c0_14 = arith.constant 0 : index
    %c0_15 = arith.constant 0 : index
    %c0_16 = arith.constant 0 : index
    %15 = vector.load %arg12[%c0_14, %c0_15, %c0_16] : memref<8x2x128xf32, #tpu.memory_space<vmem>>, vector<8x2x128xf32>
    tpu.vector_store %arg12[%c0_14, %c0_15, %c0_16], %14 {strides = array<i32>} : memref<8x2x128xf32, #tpu.memory_space<vmem>>, vector<8x2x128xf32>,
    %c0_17 = arith.constant 0 : index
    %c0_18 = arith.constant 0 : index
    %16 = vector.load %arg3[%c0_17, %c0_18] : memref<32x128xf32, #tpu.memory_space<vmem>>, vector<32x128xf32>
    %c0_19 = arith.constant 0 : index
    %c0_20 = arith.constant 0 : index
    %17 = vector.load %arg6[%c0_19, %c0_20] : memref<32x128xf32, #tpu.memory_space<vmem>>, vector<32x128xf32>
    %cst_21 = arith.constant 0.000000e+00 : f32
    %18 = vector.broadcast %cst_21 : f32 to vector<2x32xf32>
    %c0_i32 = arith.constant 0 : i32
    %c8_i32 = arith.constant 8 : i32
    %19 = arith.addi %c0_i32, %c8_i32 : i32
    %c1_i32 = arith.constant 1 : i32
    %20:4 = scf.for %arg14 = %c0_i32 to %19 step %c1_i32 iter_args(%arg15 = %18, %arg16 = %18, %arg17 = %18, %arg18 = %18) -> (vector<2x32xf32>, vector<2x32xf32>, vector<2x32xf32>, vector<2x32xf32>)  : i32 {
      %30 = arith.index_cast %arg14 : i32 to index
      %c0_34 = arith.constant 0 : index
      %c0_35 = arith.constant 0 : index
      %31 = vector.load %arg11[%30, %c0_34, %c0_35] : memref<8x2x128xf32, #tpu.memory_space<vmem>>, vector<1x2x128xf32>
      %32 = vector.shape_cast %31 : vector<1x2x128xf32> to vector<2x128xf32>
      %cst_36 = arith.constant dense<0.000000e+00> : vector<2x128xf32>
      %33 = tpu.matmul %arg15, %16, %cst_36 {dimension_numbers = #tpu.dot_dimension_numbers<[1], [0], [0], [1], [0, 0, 1, 1], [], []>} : vector<2x32xf32>, vector<32x128xf32>, vector<2x128xf32> -> vector<2x128xf32>
      %34 = arith.addf %32, %33 : vector<2x128xf32>
      %35 = vector.extract_strided_slice %34 {offsets = [0, 0], sizes = [2, 32], strides = [1, 1]} : vector<2x128xf32> to vector<2x32xf32>
      %36 = arith.negf %35 : vector<2x32xf32>
      %37 = math.exp %36 : vector<2x32xf32>
      %cst_37 = arith.constant 1.000000e+00 : f32
      %38 = vector.broadcast %cst_37 : f32 to vector<2x32xf32>
      %39 = arith.addf %38, %37 : vector<2x32xf32>
      %40 = arith.divf %38, %39 : vector<2x32xf32>
      %41 = vector.extract_strided_slice %34 {offsets = [0, 32], sizes = [2, 32], strides = [1, 1]} : vector<2x128xf32> to vector<2x32xf32>
      %42 = arith.negf %41 : vector<2x32xf32>
      %43 = math.exp %42 : vector<2x32xf32>
      %cst_38 = arith.constant 1.000000e+00 : f32
      %44 = vector.broadcast %cst_38 : f32 to vector<2x32xf32>
      %45 = arith.addf %44, %43 : vector<2x32xf32>
      %46 = arith.divf %44, %45 : vector<2x32xf32>
      %47 = vector.extract_strided_slice %34 {offsets = [0, 64], sizes = [2, 32], strides = [1, 1]} : vector<2x128xf32> to vector<2x32xf32>
      %48 = math.tanh %47 : vector<2x32xf32>
      %49 = vector.extract_strided_slice %34 {offsets = [0, 96], sizes = [2, 32], strides = [1, 1]} : vector<2x128xf32> to vector<2x32xf32>
      %50 = arith.negf %49 : vector<2x32xf32>
      %51 = math.exp %50 : vector<2x32xf32>
      %cst_39 = arith.constant 1.000000e+00 : f32
      %52 = vector.broadcast %cst_39 : f32 to vector<2x32xf32>
      %53 = arith.addf %52, %51 : vector<2x32xf32>
      %54 = arith.divf %52, %53 : vector<2x32xf32>
      %55 = arith.mulf %46, %arg16 : vector<2x32xf32>
      %56 = arith.mulf %40, %48 : vector<2x32xf32>
      %57 = arith.addf %55, %56 : vector<2x32xf32>
      %58 = math.tanh %57 : vector<2x32xf32>
      %59 = arith.mulf %54, %58 : vector<2x32xf32>
      %60 = arith.index_cast %arg14 : i32 to index
      %c0_40 = arith.constant 0 : index
      %c0_41 = arith.constant 0 : index
      %61 = vector.load %arg13[%60, %c0_40, %c0_41] : memref<8x2x64xf32, #tpu.memory_space<vmem>>, vector<1x2x32xf32>
      %62 = vector.shape_cast %61 : vector<1x2x32xf32> to vector<2x32xf32>
      %63 = vector.shape_cast %59 : vector<2x32xf32> to vector<1x2x32xf32>
      tpu.vector_store %arg13[%60, %c0_40, %c0_41], %63 {strides = array<i32>} : memref<8x2x64xf32, #tpu.memory_space<vmem>>, vector<1x2x32xf32>,
      %c7_i32 = arith.constant 7 : i32
      %64 = arith.subi %c7_i32, %arg14 : i32
      %65 = arith.index_cast %64 : i32 to index
      %c0_42 = arith.constant 0 : index
      %c0_43 = arith.constant 0 : index
      %66 = vector.load %arg12[%65, %c0_42, %c0_43] : memref<8x2x128xf32, #tpu.memory_space<vmem>>, vector<1x2x128xf32>
      %67 = vector.shape_cast %66 : vector<1x2x128xf32> to vector<2x128xf32>
      %cst_44 = arith.constant dense<0.000000e+00> : vector<2x128xf32>
      %68 = tpu.matmul %arg17, %17, %cst_44 {dimension_numbers = #tpu.dot_dimension_numbers<[1], [0], [0], [1], [0, 0, 1, 1], [], []>} : vector<2x32xf32>, vector<32x128xf32>, vector<2x128xf32> -> vector<2x128xf32>
      %69 = arith.addf %67, %68 : vector<2x128xf32>
      %70 = vector.extract_strided_slice %69 {offsets = [0, 0], sizes = [2, 32], strides = [1, 1]} : vector<2x128xf32> to vector<2x32xf32>
      %71 = arith.negf %70 : vector<2x32xf32>
      %72 = math.exp %71 : vector<2x32xf32>
      %cst_45 = arith.constant 1.000000e+00 : f32
      %73 = vector.broadcast %cst_45 : f32 to vector<2x32xf32>
      %74 = arith.addf %73, %72 : vector<2x32xf32>
      %75 = arith.divf %73, %74 : vector<2x32xf32>
      %76 = vector.extract_strided_slice %69 {offsets = [0, 32], sizes = [2, 32], strides = [1, 1]} : vector<2x128xf32> to vector<2x32xf32>
      %77 = arith.negf %76 : vector<2x32xf32>
      %78 = math.exp %77 : vector<2x32xf32>
      %cst_46 = arith.constant 1.000000e+00 : f32
      %79 = vector.broadcast %cst_46 : f32 to vector<2x32xf32>
      %80 = arith.addf %79, %78 : vector<2x32xf32>
      %81 = arith.divf %79, %80 : vector<2x32xf32>
      %82 = vector.extract_strided_slice %69 {offsets = [0, 64], sizes = [2, 32], strides = [1, 1]} : vector<2x128xf32> to vector<2x32xf32>
      %83 = math.tanh %82 : vector<2x32xf32>
      %84 = vector.extract_strided_slice %69 {offsets = [0, 96], sizes = [2, 32], strides = [1, 1]} : vector<2x128xf32> to vector<2x32xf32>
      %85 = arith.negf %84 : vector<2x32xf32>
      %86 = math.exp %85 : vector<2x32xf32>
      %cst_47 = arith.constant 1.000000e+00 : f32
      %87 = vector.broadcast %cst_47 : f32 to vector<2x32xf32>
      %88 = arith.addf %87, %86 : vector<2x32xf32>
      %89 = arith.divf %87, %88 : vector<2x32xf32>
      %90 = arith.mulf %81, %arg18 : vector<2x32xf32>
      %91 = arith.mulf %75, %83 : vector<2x32xf32>
      %92 = arith.addf %90, %91 : vector<2x32xf32>
      %93 = math.tanh %92 : vector<2x32xf32>
      %94 = arith.mulf %89, %93 : vector<2x32xf32>
      %95 = arith.index_cast %64 : i32 to index
      %c0_48 = arith.constant 0 : index
      %c32 = arith.constant 32 : index
      %96 = vector.load %arg13[%95, %c0_48, %c32] : memref<8x2x64xf32, #tpu.memory_space<vmem>>, vector<1x2x32xf32>
      %97 = vector.shape_cast %96 : vector<1x2x32xf32> to vector<2x32xf32>
      %98 = vector.shape_cast %94 : vector<2x32xf32> to vector<1x2x32xf32>
      tpu.vector_store %arg13[%95, %c0_48, %c32], %98 {strides = array<i32>} : memref<8x2x64xf32, #tpu.memory_space<vmem>>, vector<1x2x32xf32>,
      scf.yield %59, %57, %94, %92 : vector<2x32xf32>, vector<2x32xf32>, vector<2x32xf32>, vector<2x32xf32>
    }
    %c8_i32_22 = arith.constant 8 : i32
    %c0_23 = arith.constant 0 : index
    %c0_24 = arith.constant 0 : index
    %c0_25 = arith.constant 0 : index
    %21 = vector.load %arg13[%c0_23, %c0_24, %c0_25] : memref<8x2x64xf32, #tpu.memory_space<vmem>>, vector<8x2x64xf32>
    %22 = vector.shape_cast %21 : vector<8x2x64xf32> to vector<16x64xf32>
    %c0_26 = arith.constant 0 : index
    %c0_27 = arith.constant 0 : index
    %23 = vector.load %arg8[%c0_26, %c0_27] : memref<64x64xf32, #tpu.memory_space<vmem>>, vector<64x64xf32>
    %cst_28 = arith.constant dense<0.000000e+00> : vector<16x64xf32>
    %24 = tpu.matmul %22, %23, %cst_28 {dimension_numbers = #tpu.dot_dimension_numbers<[1], [0], [0], [1], [0, 0, 1, 1], [], []>} : vector<16x64xf32>, vector<64x64xf32>, vector<16x64xf32> -> vector<16x64xf32>
    %c0_29 = arith.constant 0 : index
    %c0_30 = arith.constant 0 : index
    %25 = vector.load %arg9[%c0_29, %c0_30] : memref<1x64xf32, #tpu.memory_space<vmem>>, vector<1x64xf32>
    %26 = vector.broadcast %25 : vector<1x64xf32> to vector<16x64xf32>
    %27 = arith.addf %24, %26 : vector<16x64xf32>
    %28 = vector.shape_cast %27 : vector<16x64xf32> to vector<8x2x64xf32>
    %c0_31 = arith.constant 0 : index
    %c0_32 = arith.constant 0 : index
    %c0_33 = arith.constant 0 : index
    %29 = vector.load %arg10[%c0_31, %c0_32, %c0_33] : memref<8x2x64xf32, #tpu.memory_space<vmem>>, vector<8x2x64xf32>
    tpu.vector_store %arg10[%c0_31, %c0_32, %c0_33], %28 {strides = array<i32>} : memref<8x2x64xf32, #tpu.memory_space<vmem>>, vector<8x2x64xf32>,
    return
  }
  func.func @transform_0(%arg0: i32) -> (i32, i32, i32) {
    %c0_i32 = arith.constant 0 : i32
    %c0_i32_0 = arith.constant 0 : i32
    %c0_i32_1 = arith.constant 0 : i32
    return %c0_i32, %arg0, %c0_i32_0 : i32, i32, i32
  }
  func.func @transform_1(%arg0: i32) -> (i32, i32) {
    %c0_i32 = arith.constant 0 : i32
    %c0_i32_0 = arith.constant 0 : i32
    %c0_i32_1 = arith.constant 0 : i32
    return %c0_i32, %c0_i32_0 : i32, i32
  }
  func.func @transform_2(%arg0: i32) -> (i32, i32) {
    %c0_i32 = arith.constant 0 : i32
    %c0_i32_0 = arith.constant 0 : i32
    %c0_i32_1 = arith.constant 0 : i32
    return %c0_i32, %c0_i32_0 : i32, i32
  }
  func.func @transform_3(%arg0: i32) -> (i32, i32) {
    %c0_i32 = arith.constant 0 : i32
    %c0_i32_0 = arith.constant 0 : i32
    %c0_i32_1 = arith.constant 0 : i32
    return %c0_i32, %c0_i32_0 : i32, i32
  }
  func.func @transform_4(%arg0: i32) -> (i32, i32) {
    %c0_i32 = arith.constant 0 : i32
    %c0_i32_0 = arith.constant 0 : i32
    %c0_i32_1 = arith.constant 0 : i32
    return %c0_i32, %c0_i32_0 : i32, i32
  }
  func.func @transform_5(%arg0: i32) -> (i32, i32) {
    %c0_i32 = arith.constant 0 : i32
    %c0_i32_0 = arith.constant 0 : i32
    %c0_i32_1 = arith.constant 0 : i32
    return %c0_i32, %c0_i32_0 : i32, i32
  }
  func.func @transform_6(%arg0: i32) -> (i32, i32) {
    %c0_i32 = arith.constant 0 : i32
    %c0_i32_0 = arith.constant 0 : i32
    %c0_i32_1 = arith.constant 0 : i32
    return %c0_i32, %c0_i32_0 : i32, i32
  }
  func.func @transform_7(%arg0: i32) -> (i32, i32) {
    %c0_i32 = arith.constant 0 : i32
    %c0_i32_0 = arith.constant 0 : i32
    %c0_i32_1 = arith.constant 0 : i32
    return %c0_i32, %c0_i32_0 : i32, i32
  }
  func.func @transform_8(%arg0: i32) -> (i32, i32) {
    %c0_i32 = arith.constant 0 : i32
    %c0_i32_0 = arith.constant 0 : i32
    %c0_i32_1 = arith.constant 0 : i32
    return %c0_i32, %c0_i32_0 : i32, i32
  }
  func.func @transform_9(%arg0: i32) -> (i32, i32, i32) {
    %c0_i32 = arith.constant 0 : i32
    %c0_i32_0 = arith.constant 0 : i32
    %c0_i32_1 = arith.constant 0 : i32
    return %c0_i32, %arg0, %c0_i32_0 : i32, i32, i32
  }
}

</mosaic_0001>

<llo_original>
// kernel: bidirectional_lstm.1
$region0: #{bidirectional_lstm.1}
  #allocation0 [shape = 'u32[]', space=smem, size = 0x4, offset = 0x4, fixed_abs, tag = 'smem constant byte address 0x4 - core index']
  #allocation1 [shape = 'u32[144,128]{1,0:T(1,128)}', space=vmem, size = 0x12000, scoped, tag = 'internal scratch']
  #allocation2 [shape = 'f32[8,2,128]{2,1,0:T(2,128)}', space=vmem, size = 0x2000, scoped, tag = 'scratch operand']
  #allocation3 [shape = 'f32[8,2,128]{2,1,0:T(2,128)}', space=vmem, size = 0x2000, scoped, tag = 'scratch operand']
  #allocation4 [shape = 'f32[8,2,64]{2,1,0:T(2,128)}', space=vmem, size = 0x2000, scoped, tag = 'scratch operand']
  %s0 = inlined_call_operand.vmem [shape: f32[8,2,16], index: 0, kind: input, shape index: {}]
  %s1 = inlined_call_operand.vmem [shape: f32[16,128], index: 1, kind: input, shape index: {}]
  %s2 = inlined_call_operand.vmem [shape: f32[32,128], index: 2, kind: input, shape index: {}]
  %s3 = inlined_call_operand.vmem [shape: f32[1,128], index: 3, kind: input, shape index: {}]
  %s4 = inlined_call_operand.hbm [shape: f32[16,128], index: 4, kind: input, shape index: {}]
  %s5 = inlined_call_operand.hbm [shape: f32[32,128], index: 5, kind: input, shape index: {}]
  %s6 = inlined_call_operand.vmem [shape: f32[1,128], index: 6, kind: input, shape index: {}]
  %s7 = inlined_call_operand.hbm [shape: f32[64,64], index: 7, kind: input, shape index: {}]
  %s8 = inlined_call_operand.vmem [shape: f32[1,64], index: 8, kind: input, shape index: {}]
  %s9 = inlined_call_operand.vmem [shape: f32[8,2,64], index: 9, kind: output, shape index: {}]
  %s10 = sld [smem:[#allocation0]]
  $region65: #{bidirectional_lstm.1} parent=0
    _
  %s12 = ssub.s32 1, %s10
  %s13 = scalar_select 0, %s12, %s10
  $region1: #{bidirectional_lstm.1} parent=0
    #allocation5 [shape = 'u8[8192]{0}', space=vmem, size = 0x2000, scoped, tag = 'input window, operand 4, single buffered']
    #allocation6 [shape = 's32[1]{0}', space=sflag, size = 0x4, scoped, tag = 'scoped memory for bidirectional_lstm.1']
    #allocation7 [shape = 'u8[16384]{0}', space=vmem, size = 0x4000, scoped, tag = 'input window, operand 5, single buffered']
    #allocation8 [shape = 's32[1]{0}', space=sflag, size = 0x4, scoped, tag = 'scoped memory for bidirectional_lstm.1']
    #allocation9 [shape = 'u8[32768]{0}', space=vmem, size = 0x8000, scoped, tag = 'input window, operand 7, single buffered']
    %14 = vsyncpa [#allocation6], 0
    %15 = vsyncpa [#allocation8], 0
    // Predicated region
    $region2: #{bidirectional_lstm.1} parent=1 // pred_check
      _
    $region3: #{bidirectional_lstm.1} parent=1 // pred_check_branch
      %17 = sbr.rel (0) target = $region5
    $region4: #{bidirectional_lstm.1} parent=1 // pred_region
      _
    $region5: #{bidirectional_lstm.1} parent=1 // pred_fallthru
      _
    // Predicated region
    $region6: #{bidirectional_lstm.1} parent=1 // pred_check
      _
    $region7: #{bidirectional_lstm.1} parent=1 // pred_check_branch
      %19 = sbr.rel (0) target = $region9
    $region8: #{bidirectional_lstm.1} parent=1 // pred_region
      _
    $region9: #{bidirectional_lstm.1} parent=1 // pred_fallthru
      _
    // Predicated region
    $region10: #{bidirectional_lstm.1} parent=1 // pred_check
      _
    $region11: #{bidirectional_lstm.1} parent=1 // pred_check_branch
      %21 = sbr.rel (0) target = $region13
    $region12: #{bidirectional_lstm.1} parent=1 // pred_region
      _
    $region13: #{bidirectional_lstm.1} parent=1 // pred_fallthru
      _
    // Predicated region
    $region14: #{bidirectional_lstm.1} parent=1 // pred_check
      _
    $region15: #{bidirectional_lstm.1} parent=1 // pred_check_branch
      %23 = sbr.rel (0) target = $region17
    $region16: #{bidirectional_lstm.1} parent=1 // pred_region
      _
    $region17: #{bidirectional_lstm.1} parent=1 // pred_fallthru
      _
    // Predicated region
    $region18: #{bidirectional_lstm.1} parent=1 // pred_check
      _
    $region19: #{bidirectional_lstm.1} parent=1 // pred_check_branch
      %25 = sbr.rel (0) target = $region21
    $region20: #{bidirectional_lstm.1} parent=1 // pred_region
      %s27 = ssub.s32 256, 256
      %28 = vsyncadd [#allocation6], %s27
      %s29 = sshll.u32 [#allocation5], 4
      %s30 = int_to_ptr.vmem [resolvable:$true] %s29
      %35 = dma.hbm_to_vmem [thread:$0]  %s4, 256, %s30, [#allocation6], 128, 128, 8
    $region21: #{bidirectional_lstm.1} parent=1 // pred_fallthru
      _
    // Predicated region
    $region22: #{bidirectional_lstm.1} parent=1 // pred_check
      _
    $region23: #{bidirectional_lstm.1} parent=1 // pred_check_branch
      %37 = sbr.rel (0) target = $region25
    $region24: #{bidirectional_lstm.1} parent=1 // pred_region
      %s39 = ssub.s32 512, 512
      %40 = vsyncadd [#allocation8], %s39
      %s41 = sshll.u32 [#allocation7], 4
      %s42 = int_to_ptr.vmem [resolvable:$true] %s41
      %47 = dma.hbm_to_vmem [thread:$0]  %s5, 512, %s42, [#allocation8], 128, 128, 8
    $region25: #{bidirectional_lstm.1} parent=1 // pred_fallthru
      _
    // Predicated region
    $region26: #{bidirectional_lstm.1} parent=1 // pred_check
      _
    $region27: #{bidirectional_lstm.1} parent=1 // pred_check_branch
      %49 = sbr.rel (0) target = $region29
    $region28: #{bidirectional_lstm.1} parent=1 // pred_region
      _
    $region29: #{bidirectional_lstm.1} parent=1 // pred_fallthru
      _
    // Predicated region
    $region30: #{bidirectional_lstm.1} parent=1 // pred_check
      _
    $region31: #{bidirectional_lstm.1} parent=1 // pred_check_branch
      %51 = sbr.rel (0) target = $region33
    $region32: #{bidirectional_lstm.1} parent=1 // pred_region
      %s53 = ssub.s32 1024, 1024
      %54 = vsyncadd [#allocation8], %s53
      %s55 = sshll.u32 [#allocation9], 4
      %s56 = int_to_ptr.vmem [resolvable:$true] %s55
      %61 = dma.hbm_to_vmem [thread:$0]  %s7, 1024, %s56, [#allocation8], 128, 128, 8
    $region33: #{bidirectional_lstm.1} parent=1 // pred_fallthru
      _
    // Predicated region
    $region34: #{bidirectional_lstm.1} parent=1 // pred_check
      _
    $region35: #{bidirectional_lstm.1} parent=1 // pred_check_branch
      %63 = sbr.rel (0) target = $region37
    $region36: #{bidirectional_lstm.1} parent=1 // pred_region
      _
    $region37: #{bidirectional_lstm.1} parent=1 // pred_fallthru
      _
    // Predicated region
    $region38: #{bidirectional_lstm.1} parent=1 // pred_check
      _
    $region39: #{bidirectional_lstm.1} parent=1 // pred_check_branch
      %65 = sbr.rel (0) target = $region41
    $region40: #{bidirectional_lstm.1} parent=1 // pred_region
      %66 = dma.done [#allocation6], 256
    $region41: #{bidirectional_lstm.1} parent=1 // pred_fallthru
      _
    // Predicated region
    $region42: #{bidirectional_lstm.1} parent=1 // pred_check
      _
    $region43: #{bidirectional_lstm.1} parent=1 // pred_check_branch
      %68 = sbr.rel (0) target = $region45
    $region44: #{bidirectional_lstm.1} parent=1 // pred_region
      %69 = dma.done [#allocation8], 512
    $region45: #{bidirectional_lstm.1} parent=1 // pred_fallthru
      _
    // Predicated region
    $region46: #{bidirectional_lstm.1} parent=1 // pred_check
      _
    $region47: #{bidirectional_lstm.1} parent=1 // pred_check_branch
      %71 = sbr.rel (0) target = $region49
    $region48: #{bidirectional_lstm.1} parent=1 // pred_region
      %72 = dma.done [#allocation8], 1024
    $region49: #{bidirectional_lstm.1} parent=1 // pred_fallthru
      _
    %v73 = vld [vmem:[%s0] sm:$0x3]
    %v74 = vld [vmem:[%s0 + $0x2] sm:$0x3]
    %v75 = vld [vmem:[%s0 + $0x4] sm:$0x3]
    %v76 = vld [vmem:[%s0 + $0x6] sm:$0x3]
    %v77 = vld [vmem:[%s0 + $0x8] sm:$0x3]
    %v78 = vld [vmem:[%s0 + $0xa] sm:$0x3]
    %v79 = vld [vmem:[%s0 + $0xc] sm:$0x3]
    %v80 = vld [vmem:[%s0 + $0xe] sm:$0x3]
    %v81 = vld [vmem:[%s1] sm:$0xff]
    %v82 = vld [vmem:[%s1 + $0x8] sm:$0xff]
    %v83 = vld [vmem:[%s3] sm:$0x1]
    %v85 = vlaneseq
    %v86 = vshrl.u32 %v85, 7
    %v87 = vsub.s32 0, %v86
    %v88 = vrot.slane %v83, %v87
    %v98 = vcombine.low %v73, %v74
    %v99 = vcombine.low %v75, %v76
    %v101 = vunpack.c.l.s4 1983009808
    %v102 = vunpack.c.0.s8 %v101
    %v103 = vlaneseq
    %v104 = vshrl.u32 %v103, 7
    %v105 = vsub.s32 %v102, %v104
    %v106 = vrot.slane %v98, %v105
    %v108 = vunpack.c.l.s4 1983009808
    %v109 = vunpack.c.0.s8 %v108
    %v110 = vlaneseq
    %v111 = vshrl.u32 %v110, 7
    %v112 = vsub.s32 %v109, %v111
    %v113 = vrot.slane %v99, %v112
    %v114 = vcombine.low %v106, %v113
    %v115 = vcombine.low %v77, %v78
    %v116 = vcombine.low %v79, %v80
    %v118 = vunpack.c.l.s4 1983009808
    %v119 = vunpack.c.0.s8 %v118
    %v120 = vlaneseq
    %v121 = vshrl.u32 %v120, 7
    %v122 = vsub.s32 %v119, %v121
    %v123 = vrot.slane %v115, %v122
    %v125 = vunpack.c.l.s4 1983009808
    %v126 = vunpack.c.0.s8 %v125
    %v127 = vlaneseq
    %v128 = vshrl.u32 %v127, 7
    %v129 = vsub.s32 %v126, %v128
    %v130 = vrot.slane %v116, %v129
    %v131 = vcombine.low %v123, %v130
    %vm132 = vcmask 130048
    %v133 = vsel %vm132, %v114, 0
    %v135 = vsel %vm132, %v131, 0
    %137 = vmatprep.subr.mxu0 0.0
    %138 = vmatpush1.msra.mxu0 %v81
    %139 = vmatprep.subr.mxu0 0.0
    %140 = vmatpush1.msra.mxu0 %v82
    %141 = vmatprep.subr.mxu0 0.0
    %142 = vmatpush1.msra.mxu0 0.0
    %143 = vmatprep.subr.mxu0 0.0
    %144 = vmatpush1.msra.mxu0 0.0
    %145 = vmatprep.subr.mxu0 0.0
    %146 = vmatpush1.msra.mxu0 0.0
    %147 = vmatprep.subr.mxu0 0.0
    %148 = vmatpush1.msra.mxu0 0.0
    %149 = vmatprep.subr.mxu0 0.0
    %150 = vmatpush1.msra.mxu0 0.0
    %151 = vmatprep.subr.mxu0 0.0
    %152 = vmatpush1.msra.mxu0 0.0
    %153 = vmatprep.subr.mxu0 0.0
    %154 = vmatpush1.msra.mxu0 0.0
    %155 = vmatprep.subr.mxu0 0.0
    %156 = vmatpush1.msra.mxu0 0.0
    %157 = vmatprep.subr.mxu0 0.0
    %158 = vmatpush1.msra.mxu0 0.0
    %159 = vmatprep.subr.mxu0 0.0
    %160 = vmatpush1.msra.mxu0 0.0
    %161 = vmatprep.subr.mxu0 0.0
    %162 = vmatpush1.msra.mxu0 0.0
    %163 = vmatprep.subr.mxu0 0.0
    %164 = vmatpush1.msra.mxu0 0.0
    %165 = vmatprep.subr.mxu0 0.0
    %166 = vmatpush1.msra.mxu0 0.0
    %167 = vmatprep.subr.mxu0 0.0
    %168 = vmatpush1.msra.mxu0 0.0
    %169 = vmatprep.subr.mxu0 0.0
    %170 = vmatpush1.msra.mxu0 0.0
    %171 = vmatprep.subr.mxu0 0.0
    %172 = vmatpush1.msra.mxu0 0.0
    %173 = vmatprep.subr.mxu0 0.0
    %174 = vmatpush1.msra.mxu0 0.0
    %175 = vmatprep.subr.mxu0 0.0
    %176 = vmatpush1.msra.mxu0 0.0
    %177 = vmatprep.subr.mxu0 0.0
    %178 = vmatpush1.msra.mxu0 0.0
    %179 = vmatprep.subr.mxu0 0.0
    %180 = vmatpush1.msra.mxu0 0.0
    %181 = vmatprep.subr.mxu0 0.0
    %182 = vmatpush1.msra.mxu0 0.0
    %183 = vmatprep.subr.mxu0 0.0
    %184 = vmatpush1.msra.mxu0 0.0
    %185 = vmatprep.subr.mxu0 0.0
    %186 = vmatpush1.msra.mxu0 0.0
    %187 = vmatprep.subr.mxu0 0.0
    %188 = vmatpush1.msra.mxu0 0.0
    %189 = vmatprep.subr.mxu0 0.0
    %190 = vmatpush1.msra.mxu0 0.0
    %191 = vmatprep.subr.mxu0 0.0
    %192 = vmatpush1.msra.mxu0 0.0
    %193 = vmatprep.subr.mxu0 0.0
    %194 = vmatpush1.msra.mxu0 0.0
    %195 = vmatprep.subr.mxu0 0.0
    %196 = vmatpush1.msra.mxu0 0.0
    %197 = vmatprep.subr.mxu0 0.0
    %198 = vmatpush1.msra.mxu0 0.0
    %199 = vmatprep.subr.mxu0 0.0
    %200 = vmatpush1.msra.mxu0 0.0
    %201 = vmatprep.mubr.f32.mxu0 0.0
    %202 = vmatmul.mubr.f32.gmra.mrb[0].mxu0 %v133
    %v203 = vpop.f32.mrb[0].mxu0
    %v204 = vadd.f32 %v88, %v203
    %v205 = vpop.f32.mrb[0].mxu0
    %206 = vmatprep.mubr.f32.mxu0 0.0
    %207 = vmatmul.mubr.f32.gmra.mrb[0].mxu0 %v135
    %v208 = vpop.f32.mrb[0].mxu0
    %v209 = vadd.f32 %v88, %v208
    %v210 = vpop.f32.mrb[0].mxu0
    %211 = vdwg.mxu0
    %v214 = vcombine.high %v204, %v204
    %v216 = vunpack.c.l.s4 1983009808
    %v217 = vunpack.c.0.s8 %v216
    %v218 = vlaneseq
    %v219 = vshrl.u32 %v218, 7
    %v220 = vsub.s32 %v217, %v219
    %v221 = vrot.slane %v204, %v220
    %v223 = vunpack.c.l.s4 1983009808
    %v224 = vunpack.c.0.s8 %v223
    %v225 = vlaneseq
    %v226 = vshrl.u32 %v225, 7
    %v227 = vsub.s32 %v224, %v226
    %v228 = vrot.slane %v214, %v227
    %v229 = vcombine.high %v221, %v221
    %v230 = vcombine.high %v228, %v228
    %v231 = vcombine.high %v209, %v209
    %v233 = vunpack.c.l.s4 1983009808
    %v234 = vunpack.c.0.s8 %v233
    %v235 = vlaneseq
    %v236 = vshrl.u32 %v235, 7
    %v237 = vsub.s32 %v234, %v236
    %v238 = vrot.slane %v209, %v237
    %v240 = vunpack.c.l.s4 1983009808
    %v241 = vunpack.c.0.s8 %v240
    %v242 = vlaneseq
    %v243 = vshrl.u32 %v242, 7
    %v244 = vsub.s32 %v241, %v243
    %v245 = vrot.slane %v231, %v244
    %v246 = vcombine.high %v238, %v238
    %v247 = vcombine.high %v245, %v245
    %256 = vst [vmem:[#allocation2] sm:$0x3] %v221
    %257 = vst [vmem:[#allocation2 + $0x2] sm:$0x3] %v229
    %258 = vst [vmem:[#allocation2 + $0x4] sm:$0x3] %v228
    %259 = vst [vmem:[#allocation2 + $0x6] sm:$0x3] %v230
    %260 = vst [vmem:[#allocation2 + $0x8] sm:$0x3] %v238
    %261 = vst [vmem:[#allocation2 + $0xa] sm:$0x3] %v246
    %262 = vst [vmem:[#allocation2 + $0xc] sm:$0x3] %v245
    %263 = vst [vmem:[#allocation2 + $0xe] sm:$0x3] %v247
    %v264 = vld [vmem:[#allocation5] sm:$0xff]
    %v265 = vld [vmem:[#allocation5 + $0x8] sm:$0xff]
    %v266 = vld [vmem:[%s6] sm:$0x1]
    %v268 = vlaneseq
    %v269 = vshrl.u32 %v268, 7
    %v270 = vsub.s32 0, %v269
    %v271 = vrot.slane %v266, %v270
    %273 = vmatprep.subr.mxu0 0.0
    %274 = vmatpush1.msra.mxu0 %v264
    %275 = vmatprep.subr.mxu0 0.0
    %276 = vmatpush1.msra.mxu0 %v265
    %277 = vmatprep.subr.mxu0 0.0
    %278 = vmatpush1.msra.mxu0 0.0
    %279 = vmatprep.subr.mxu0 0.0
    %280 = vmatpush1.msra.mxu0 0.0
    %281 = vmatprep.subr.mxu0 0.0
    %282 = vmatpush1.msra.mxu0 0.0
    %283 = vmatprep.subr.mxu0 0.0
    %284 = vmatpush1.msra.mxu0 0.0
    %285 = vmatprep.subr.mxu0 0.0
    %286 = vmatpush1.msra.mxu0 0.0
    %287 = vmatprep.subr.mxu0 0.0
    %288 = vmatpush1.msra.mxu0 0.0
    %289 = vmatprep.subr.mxu0 0.0
    %290 = vmatpush1.msra.mxu0 0.0
    %291 = vmatprep.subr.mxu0 0.0
    %292 = vmatpush1.msra.mxu0 0.0
    %293 = vmatprep.subr.mxu0 0.0
    %294 = vmatpush1.msra.mxu0 0.0
    %295 = vmatprep.subr.mxu0 0.0
    %296 = vmatpush1.msra.mxu0 0.0
    %297 = vmatprep.subr.mxu0 0.0
    %298 = vmatpush1.msra.mxu0 0.0
    %299 = vmatprep.subr.mxu0 0.0
    %300 = vmatpush1.msra.mxu0 0.0
    %301 = vmatprep.subr.mxu0 0.0
    %302 = vmatpush1.msra.mxu0 0.0
    %303 = vmatprep.subr.mxu0 0.0
    %304 = vmatpush1.msra.mxu0 0.0
    %305 = vmatprep.subr.mxu0 0.0
    %306 = vmatpush1.msra.mxu0 0.0
    %307 = vmatprep.subr.mxu0 0.0
    %308 = vmatpush1.msra.mxu0 0.0
    %309 = vmatprep.subr.mxu0 0.0
    %310 = vmatpush1.msra.mxu0 0.0
    %311 = vmatprep.subr.mxu0 0.0
    %312 = vmatpush1.msra.mxu0 0.0
    %313 = vmatprep.subr.mxu0 0.0
    %314 = vmatpush1.msra.mxu0 0.0
    %315 = vmatprep.subr.mxu0 0.0
    %316 = vmatpush1.msra.mxu0 0.0
    %317 = vmatprep.subr.mxu0 0.0
    %318 = vmatpush1.msra.mxu0 0.0
    %319 = vmatprep.subr.mxu0 0.0
    %320 = vmatpush1.msra.mxu0 0.0
    %321 = vmatprep.subr.mxu0 0.0
    %322 = vmatpush1.msra.mxu0 0.0
    %323 = vmatprep.subr.mxu0 0.0
    %324 = vmatpush1.msra.mxu0 0.0
    %325 = vmatprep.subr.mxu0 0.0
    %326 = vmatpush1.msra.mxu0 0.0
    %327 = vmatprep.subr.mxu0 0.0
    %328 = vmatpush1.msra.mxu0 0.0
    %329 = vmatprep.subr.mxu0 0.0
    %330 = vmatpush1.msra.mxu0 0.0
    %331 = vmatprep.subr.mxu0 0.0
    %332 = vmatpush1.msra.mxu0 0.0
    %333 = vmatprep.subr.mxu0 0.0
    %334 = vmatpush1.msra.mxu0 0.0
    %335 = vmatprep.subr.mxu0 0.0
    %336 = vmatpush1.msra.mxu0 0.0
    %337 = vmatprep.mubr.f32.mxu0 0.0
    %338 = vmatmul.mubr.f32.gmra.mrb[0].mxu0 %v133
    %v339 = vpop.f32.mrb[0].mxu0
    %v340 = vadd.f32 %v271, %v339
    %v341 = vpop.f32.mrb[0].mxu0
    %342 = vmatprep.mubr.f32.mxu0 0.0
    %343 = vmatmul.mubr.f32.gmra.mrb[0].mxu0 %v135
    %v344 = vpop.f32.mrb[0].mxu0
    %v345 = vadd.f32 %v271, %v344
    %v346 = vpop.f32.mrb[0].mxu0
    %347 = vdwg.mxu0
    %v350 = vcombine.high %v340, %v340
    %v352 = vunpack.c.l.s4 1983009808
    %v353 = vunpack.c.0.s8 %v352
    %v354 = vlaneseq
    %v355 = vshrl.u32 %v354, 7
    %v356 = vsub.s32 %v353, %v355
    %v357 = vrot.slane %v340, %v356
    %v359 = vunpack.c.l.s4 1983009808
    %v360 = vunpack.c.0.s8 %v359
    %v361 = vlaneseq
    %v362 = vshrl.u32 %v361, 7
    %v363 = vsub.s32 %v360, %v362
    %v364 = vrot.slane %v350, %v363
    %v365 = vcombine.high %v357, %v357
    %v366 = vcombine.high %v364, %v364
    %v367 = vcombine.high %v345, %v345
    %v369 = vunpack.c.l.s4 1983009808
    %v370 = vunpack.c.0.s8 %v369
    %v371 = vlaneseq
    %v372 = vshrl.u32 %v371, 7
    %v373 = vsub.s32 %v370, %v372
    %v374 = vrot.slane %v345, %v373
    %v376 = vunpack.c.l.s4 1983009808
    %v377 = vunpack.c.0.s8 %v376
    %v378 = vlaneseq
    %v379 = vshrl.u32 %v378, 7
    %v380 = vsub.s32 %v377, %v379
    %v381 = vrot.slane %v367, %v380
    %v382 = vcombine.high %v374, %v374
    %v383 = vcombine.high %v381, %v381
    %392 = vst [vmem:[#allocation3] sm:$0x3] %v357
    %393 = vst [vmem:[#allocation3 + $0x2] sm:$0x3] %v365
    %394 = vst [vmem:[#allocation3 + $0x4] sm:$0x3] %v364
    %395 = vst [vmem:[#allocation3 + $0x6] sm:$0x3] %v366
    %396 = vst [vmem:[#allocation3 + $0x8] sm:$0x3] %v374
    %397 = vst [vmem:[#allocation3 + $0xa] sm:$0x3] %v382
    %398 = vst [vmem:[#allocation3 + $0xc] sm:$0x3] %v381
    %399 = vst [vmem:[#allocation3 + $0xe] sm:$0x3] %v383
    %v400 = vld [vmem:[%s2] sm:$0xff]
    %v401 = vld [vmem:[%s2 + $0x8] sm:$0xff]
    %v402 = vld [vmem:[%s2 + $0x10] sm:$0xff]
    %v403 = vld [vmem:[%s2 + $0x18] sm:$0xff]
    %v404 = vld [vmem:[#allocation7] sm:$0xff]
    %v405 = vld [vmem:[#allocation7 + $0x8] sm:$0xff]
    %v406 = vld [vmem:[#allocation7 + $0x10] sm:$0xff]
    %v407 = vld [vmem:[#allocation7 + $0x18] sm:$0xff]
    loop: start=0, step=1, limit=8
    $region50: #{bidirectional_lstm.1} parent=1 // loop_pre_header
      _
    $region51: #{bidirectional_lstm.1} parent=1 // loop_header
      %s409 = sphi 0, %s413
      %p410 = scmp.ge.s32.totalorder %s409, 8
      %v414 = vphi 0.0, %v521
      %v415 = vphi 0.0, %v515
      %v416 = vphi 0.0, %v632
      %v417 = vphi 0.0, %v626
    $region52: #{bidirectional_lstm.1} parent=1 // loop_header_branch
      %412 = sbr.rel (%p410) target = $region56
    $region53: #{bidirectional_lstm.1} parent=1 // loop_body
      %s418 = smul.u32 %s409, 2
      %s419 = scalar_lea.vmem [#allocation2], %s418
      %v420 = vld [vmem:[%s419] sm:$0x3]
      %422 = vrot.lane.b32.xlu0 %v414, 32
      %v423 = vpop.permute.xlu0 %422
      %vm424 = vcmask 261120
      %v425 = vsel %vm424, %v423, 0
      %427 = vmatprep.subr.mxu0 0.0
      %428 = vmatpush1.msra.mxu0 %v400
      %429 = vmatprep.subr.mxu0 0.0
      %430 = vmatpush1.msra.mxu0 %v401
      %431 = vmatprep.subr.mxu0 0.0
      %432 = vmatpush1.msra.mxu0 %v402
      %433 = vmatprep.subr.mxu0 0.0
      %434 = vmatpush1.msra.mxu0 %v403
      %435 = vmatprep.subr.mxu0 0.0
      %436 = vmatpush1.msra.mxu0 0.0
      %437 = vmatprep.subr.mxu0 0.0
      %438 = vmatpush1.msra.mxu0 0.0
      %439 = vmatprep.subr.mxu0 0.0
      %440 = vmatpush1.msra.mxu0 0.0
      %441 = vmatprep.subr.mxu0 0.0
      %442 = vmatpush1.msra.mxu0 0.0
      %443 = vmatprep.subr.mxu0 0.0
      %444 = vmatpush1.msra.mxu0 0.0
      %445 = vmatprep.subr.mxu0 0.0
      %446 = vmatpush1.msra.mxu0 0.0
      %447 = vmatprep.subr.mxu0 0.0
      %448 = vmatpush1.msra.mxu0 0.0
      %449 = vmatprep.subr.mxu0 0.0
      %450 = vmatpush1.msra.mxu0 0.0
      %451 = vmatprep.subr.mxu0 0.0
      %452 = vmatpush1.msra.mxu0 0.0
      %453 = vmatprep.subr.mxu0 0.0
      %454 = vmatpush1.msra.mxu0 0.0
      %455 = vmatprep.subr.mxu0 0.0
      %456 = vmatpush1.msra.mxu0 0.0
      %457 = vmatprep.subr.mxu0 0.0
      %458 = vmatpush1.msra.mxu0 0.0
      %459 = vmatprep.subr.mxu0 0.0
      %460 = vmatpush1.msra.mxu0 0.0
      %461 = vmatprep.subr.mxu0 0.0
      %462 = vmatpush1.msra.mxu0 0.0
      %463 = vmatprep.subr.mxu0 0.0
      %464 = vmatpush1.msra.mxu0 0.0
      %465 = vmatprep.subr.mxu0 0.0
      %466 = vmatpush1.msra.mxu0 0.0
      %467 = vmatprep.subr.mxu0 0.0
      %468 = vmatpush1.msra.mxu0 0.0
      %469 = vmatprep.subr.mxu0 0.0
      %470 = vmatpush1.msra.mxu0 0.0
      %471 = vmatprep.subr.mxu0 0.0
      %472 = vmatpush1.msra.mxu0 0.0
      %473 = vmatprep.subr.mxu0 0.0
      %474 = vmatpush1.msra.mxu0 0.0
      %475 = vmatprep.subr.mxu0 0.0
      %476 = vmatpush1.msra.mxu0 0.0
      %477 = vmatprep.subr.mxu0 0.0
      %478 = vmatpush1.msra.mxu0 0.0
      %479 = vmatprep.subr.mxu0 0.0
      %480 = vmatpush1.msra.mxu0 0.0
      %481 = vmatprep.subr.mxu0 0.0
      %482 = vmatpush1.msra.mxu0 0.0
      %483 = vmatprep.subr.mxu0 0.0
      %484 = vmatpush1.msra.mxu0 0.0
      %485 = vmatprep.subr.mxu0 0.0
      %486 = vmatpush1.msra.mxu0 0.0
      %487 = vmatprep.subr.mxu0 0.0
      %488 = vmatpush1.msra.mxu0 0.0
      %489 = vmatprep.subr.mxu0 0.0
      %490 = vmatpush1.msra.mxu0 0.0
      %491 = vmatprep.mubr.f32.mxu0 0.0
      %492 = vmatmul.mubr.f32.gmra.mrb[0].mxu0 %v425
      %v493 = vpop.f32.mrb[0].mxu0
      %v494 = vadd.f32 0.0, %v493
      %v495 = vpop.f32.mrb[0].mxu0
      %496 = vdwg.mxu0
      %v497 = vadd.f32 %v420, %v494
      %v498 = vxor.u32 %v497, 2147483648
      %v499 = vmul.f32 %v498, 1.442695
      %v500 = vpow.pop %v499
      %v501 = vadd.f32 %v500, 1.0
      %v502 = vrcp.pop %v501
      %v503 = vmul.f32 1.0, %v502
      %v504 = vtanh.pop %v497
      %v505 = vmul.f32 %v503, %v415
      %507 = vrot.lane.b32.xlu0 %v504, 64
      %v508 = vpop.permute.xlu0 %507
      %v510 = vmul.f32 %v503, %v508
      %512 = vrot.lane.b32.xlu0 %v510, 32
      %v513 = vpop.permute.xlu0 %512
      %v515 = vadd.f32 %v505, %v513
      %v516 = vtanh.pop %v515
      %518 = vrot.lane.b32.xlu0 %v516, 64
      %v519 = vpop.permute.xlu0 %518
      %v521 = vmul.f32 %v503, %v519
      %523 = vrot.lane.b32.xlu0 %v521, 32
      %v524 = vpop.permute.xlu0 %523
      %s526 = scalar_lea.vmem [#allocation4], %s418
      %vm527 = vcmask 254976
      %528 = vst.msk [vmem:[%s526] sm:$0x3] %vm527, %v524
      %s529 = ssub.s32 7, %s409
      %s530 = smul.u32 %s529, 2
      %s531 = scalar_lea.vmem [#allocation3], %s530
      %v532 = vld [vmem:[%s531] sm:$0x3]
      %534 = vrot.lane.b32.xlu0 %v416, 32
      %v535 = vpop.permute.xlu0 %534
      %v536 = vsel %vm424, %v535, 0
      %538 = vmatprep.subr.mxu0 0.0
      %539 = vmatpush1.msra.mxu0 %v404
      %540 = vmatprep.subr.mxu0 0.0
      %541 = vmatpush1.msra.mxu0 %v405
      %542 = vmatprep.subr.mxu0 0.0
      %543 = vmatpush1.msra.mxu0 %v406
      %544 = vmatprep.subr.mxu0 0.0
      %545 = vmatpush1.msra.mxu0 %v407
      %546 = vmatprep.subr.mxu0 0.0
      %547 = vmatpush1.msra.mxu0 0.0
      %548 = vmatprep.subr.mxu0 0.0
      %549 = vmatpush1.msra.mxu0 0.0
      %550 = vmatprep.subr.mxu0 0.0
      %551 = vmatpush1.msra.mxu0 0.0
      %552 = vmatprep.subr.mxu0 0.0
      %553 = vmatpush1.msra.mxu0 0.0
      %554 = vmatprep.subr.mxu0 0.0
      %555 = vmatpush1.msra.mxu0 0.0
      %556 = vmatprep.subr.mxu0 0.0
      %557 = vmatpush1.msra.mxu0 0.0
      %558 = vmatprep.subr.mxu0 0.0
      %559 = vmatpush1.msra.mxu0 0.0
      %560 = vmatprep.subr.mxu0 0.0
      %561 = vmatpush1.msra.mxu0 0.0
      %562 = vmatprep.subr.mxu0 0.0
      %563 = vmatpush1.msra.mxu0 0.0
      %564 = vmatprep.subr.mxu0 0.0
      %565 = vmatpush1.msra.mxu0 0.0
      %566 = vmatprep.subr.mxu0 0.0
      %567 = vmatpush1.msra.mxu0 0.0
      %568 = vmatprep.subr.mxu0 0.0
      %569 = vmatpush1.msra.mxu0 0.0
      %570 = vmatprep.subr.mxu0 0.0
      %571 = vmatpush1.msra.mxu0 0.0
      %572 = vmatprep.subr.mxu0 0.0
      %573 = vmatpush1.msra.mxu0 0.0
      %574 = vmatprep.subr.mxu0 0.0
      %575 = vmatpush1.msra.mxu0 0.0
      %576 = vmatprep.subr.mxu0 0.0
      %577 = vmatpush1.msra.mxu0 0.0
      %578 = vmatprep.subr.mxu0 0.0
      %579 = vmatpush1.msra.mxu0 0.0
      %580 = vmatprep.subr.mxu0 0.0
      %581 = vmatpush1.msra.mxu0 0.0
      %582 = vmatprep.subr.mxu0 0.0
      %583 = vmatpush1.msra.mxu0 0.0
      %584 = vmatprep.subr.mxu0 0.0
      %585 = vmatpush1.msra.mxu0 0.0
      %586 = vmatprep.subr.mxu0 0.0
      %587 = vmatpush1.msra.mxu0 0.0
      %588 = vmatprep.subr.mxu0 0.0
      %589 = vmatpush1.msra.mxu0 0.0
      %590 = vmatprep.subr.mxu0 0.0
      %591 = vmatpush1.msra.mxu0 0.0
      %592 = vmatprep.subr.mxu0 0.0
      %593 = vmatpush1.msra.mxu0 0.0
      %594 = vmatprep.subr.mxu0 0.0
      %595 = vmatpush1.msra.mxu0 0.0
      %596 = vmatprep.subr.mxu0 0.0
      %597 = vmatpush1.msra.mxu0 0.0
      %598 = vmatprep.subr.mxu0 0.0
      %599 = vmatpush1.msra.mxu0 0.0
      %600 = vmatprep.subr.mxu0 0.0
      %601 = vmatpush1.msra.mxu0 0.0
      %602 = vmatprep.mubr.f32.mxu0 0.0
      %603 = vmatmul.mubr.f32.gmra.mrb[0].mxu0 %v536
      %v604 = vpop.f32.mrb[0].mxu0
      %v605 = vadd.f32 0.0, %v604
      %v606 = vpop.f32.mrb[0].mxu0
      %607 = vdwg.mxu0
      %v608 = vadd.f32 %v532, %v605
      %v609 = vxor.u32 %v608, 2147483648
      %v610 = vmul.f32 %v609, 1.442695
      %v611 = vpow.pop %v610
      %v612 = vadd.f32 %v611, 1.0
      %v613 = vrcp.pop %v612
      %v614 = vmul.f32 1.0, %v613
      %v615 = vtanh.pop %v608
      %v616 = vmul.f32 %v614, %v417
      %618 = vrot.lane.b32.xlu0 %v615, 64
      %v619 = vpop.permute.xlu0 %618
      %v621 = vmul.f32 %v614, %v619
      %623 = vrot.lane.b32.xlu0 %v621, 32
      %v624 = vpop.permute.xlu0 %623
      %v626 = vadd.f32 %v616, %v624
      %v627 = vtanh.pop %v626
      %629 = vrot.lane.b32.xlu0 %v627, 64
      %v630 = vpop.permute.xlu0 %629
      %v632 = vmul.f32 %v614, %v630
      %634 = vrot.lane.b32.xlu0 %v632, 64
      %v635 = vpop.permute.xlu0 %634
      %s637 = scalar_lea.vmem [#allocation4], %s530
      %vm638 = vcmask 517376
      %639 = vst.msk [vmem:[%s637] sm:$0x3] %vm638, %v635
    $region54: #{bidirectional_lstm.1} parent=1 // loop_footer
      %s413 = sadd.s32 1, %s409
    $region55: #{bidirectional_lstm.1} parent=1 // loop_footer_branch
      %408 = sbr.rel target = $region51
    $region56: #{bidirectional_lstm.1} parent=1 // loop_exit
      _
    %v640 = vld [vmem:[#allocation4] sm:$0x3]
    %v641 = vld [vmem:[#allocation4 + $0x2] sm:$0x3]
    %v642 = vld [vmem:[#allocation4 + $0x4] sm:$0x3]
    %v643 = vld [vmem:[#allocation4 + $0x6] sm:$0x3]
    %v644 = vld [vmem:[#allocation4 + $0x8] sm:$0x3]
    %v645 = vld [vmem:[#allocation4 + $0xa] sm:$0x3]
    %v646 = vld [vmem:[#allocation4 + $0xc] sm:$0x3]
    %v647 = vld [vmem:[#allocation4 + $0xe] sm:$0x3]
    %v648 = vld [vmem:[#allocation9] sm:$0xff]
    %v649 = vld [vmem:[#allocation9 + $0x8] sm:$0xff]
    %v650 = vld [vmem:[#allocation9 + $0x10] sm:$0xff]
    %v651 = vld [vmem:[#allocation9 + $0x18] sm:$0xff]
    %v652 = vld [vmem:[#allocation9 + $0x20] sm:$0xff]
    %v653 = vld [vmem:[#allocation9 + $0x28] sm:$0xff]
    %v654 = vld [vmem:[#allocation9 + $0x30] sm:$0xff]
    %v655 = vld [vmem:[#allocation9 + $0x38] sm:$0xff]
    %v656 = vld [vmem:[%s8] sm:$0x1]
    %v658 = vlaneseq
    %v659 = vshrl.u32 %v658, 7
    %v660 = vsub.s32 0, %v659
    %v661 = vrot.slane %v656, %v660
    %v671 = vcombine.low %v640, %v641
    %v672 = vcombine.low %v642, %v643
    %v674 = vunpack.c.l.s4 1983009808
    %v675 = vunpack.c.0.s8 %v674
    %v676 = vlaneseq
    %v677 = vshrl.u32 %v676, 7
    %v678 = vsub.s32 %v675, %v677
    %v679 = vrot.slane %v671, %v678
    %v681 = vunpack.c.l.s4 1983009808
    %v682 = vunpack.c.0.s8 %v681
    %v683 = vlaneseq
    %v684 = vshrl.u32 %v683, 7
    %v685 = vsub.s32 %v682, %v684
    %v686 = vrot.slane %v672, %v685
    %v687 = vcombine.low %v679, %v686
    %v688 = vcombine.low %v644, %v645
    %v689 = vcombine.low %v646, %v647
    %v691 = vunpack.c.l.s4 1983009808
    %v692 = vunpack.c.0.s8 %v691
    %v693 = vlaneseq
    %v694 = vshrl.u32 %v693, 7
    %v695 = vsub.s32 %v692, %v694
    %v696 = vrot.slane %v688, %v695
    %v698 = vunpack.c.l.s4 1983009808
    %v699 = vunpack.c.0.s8 %v698
    %v700 = vlaneseq
    %v701 = vshrl.u32 %v700, 7
    %v702 = vsub.s32 %v699, %v701
    %v703 = vrot.slane %v689, %v702
    %v704 = vcombine.low %v696, %v703
    %vm705 = vcmask 523264
    %v706 = vsel %vm705, %v687, 0
    %v708 = vsel %vm705, %v704, 0
    %710 = vmatprep.subr.mxu0 0.0
    %711 = vmatpush1.msra.mxu0 %v648
    %712 = vmatprep.subr.mxu0 0.0
    %713 = vmatpush1.msra.mxu0 %v649
    %714 = vmatprep.subr.mxu0 0.0
    %715 = vmatpush1.msra.mxu0 %v650
    %716 = vmatprep.subr.mxu0 0.0
    %717 = vmatpush1.msra.mxu0 %v651
    %718 = vmatprep.subr.mxu0 0.0
    %719 = vmatpush1.msra.mxu0 %v652
    %720 = vmatprep.subr.mxu0 0.0
    %721 = vmatpush1.msra.mxu0 %v653
    %722 = vmatprep.subr.mxu0 0.0
    %723 = vmatpush1.msra.mxu0 %v654
    %724 = vmatprep.subr.mxu0 0.0
    %725 = vmatpush1.msra.mxu0 %v655
    %726 = vmatprep.subr.mxu0 0.0
    %727 = vmatpush1.msra.mxu0 0.0
    %728 = vmatprep.subr.mxu0 0.0
    %729 = vmatpush1.msra.mxu0 0.0
    %730 = vmatprep.subr.mxu0 0.0
    %731 = vmatpush1.msra.mxu0 0.0
    %732 = vmatprep.subr.mxu0 0.0
    %733 = vmatpush1.msra.mxu0 0.0
    %734 = vmatprep.subr.mxu0 0.0
    %735 = vmatpush1.msra.mxu0 0.0
    %736 = vmatprep.subr.mxu0 0.0
    %737 = vmatpush1.msra.mxu0 0.0
    %738 = vmatprep.subr.mxu0 0.0
    %739 = vmatpush1.msra.mxu0 0.0
    %740 = vmatprep.subr.mxu0 0.0
    %741 = vmatpush1.msra.mxu0 0.0
    %742 = vmatprep.subr.mxu0 0.0
    %743 = vmatpush1.msra.mxu0 0.0
    %744 = vmatprep.subr.mxu0 0.0
    %745 = vmatpush1.msra.mxu0 0.0
    %746 = vmatprep.subr.mxu0 0.0
    %747 = vmatpush1.msra.mxu0 0.0
    %748 = vmatprep.subr.mxu0 0.0
    %749 = vmatpush1.msra.mxu0 0.0
    %750 = vmatprep.subr.mxu0 0.0
    %751 = vmatpush1.msra.mxu0 0.0
    %752 = vmatprep.subr.mxu0 0.0
    %753 = vmatpush1.msra.mxu0 0.0
    %754 = vmatprep.subr.mxu0 0.0
    %755 = vmatpush1.msra.mxu0 0.0
    %756 = vmatprep.subr.mxu0 0.0
    %757 = vmatpush1.msra.mxu0 0.0
    %758 = vmatprep.subr.mxu0 0.0
    %759 = vmatpush1.msra.mxu0 0.0
    %760 = vmatprep.subr.mxu0 0.0
    %761 = vmatpush1.msra.mxu0 0.0
    %762 = vmatprep.subr.mxu0 0.0
    %763 = vmatpush1.msra.mxu0 0.0
    %764 = vmatprep.subr.mxu0 0.0
    %765 = vmatpush1.msra.mxu0 0.0
    %766 = vmatprep.subr.mxu0 0.0
    %767 = vmatpush1.msra.mxu0 0.0
    %768 = vmatprep.subr.mxu0 0.0
    %769 = vmatpush1.msra.mxu0 0.0
    %770 = vmatprep.subr.mxu0 0.0
    %771 = vmatpush1.msra.mxu0 0.0
    %772 = vmatprep.subr.mxu0 0.0
    %773 = vmatpush1.msra.mxu0 0.0
    %774 = vmatprep.mubr.f32.mxu0 0.0
    %775 = vmatmul.mubr.f32.gmra.mrb[0].mxu0 %v706
    %v776 = vpop.f32.mrb[0].mxu0
    %v777 = vadd.f32 %v661, %v776
    %v778 = vpop.f32.mrb[0].mxu0
    %779 = vmatprep.mubr.f32.mxu0 0.0
    %780 = vmatmul.mubr.f32.gmra.mrb[0].mxu0 %v708
    %v781 = vpop.f32.mrb[0].mxu0
    %v782 = vadd.f32 %v661, %v781
    %v783 = vpop.f32.mrb[0].mxu0
    %784 = vdwg.mxu0
    %v787 = vcombine.high %v777, %v777
    %v789 = vunpack.c.l.s4 1983009808
    %v790 = vunpack.c.0.s8 %v789
    %v791 = vlaneseq
    %v792 = vshrl.u32 %v791, 7
    %v793 = vsub.s32 %v790, %v792
    %v794 = vrot.slane %v777, %v793
    %v796 = vunpack.c.l.s4 1983009808
    %v797 = vunpack.c.0.s8 %v796
    %v798 = vlaneseq
    %v799 = vshrl.u32 %v798, 7
    %v800 = vsub.s32 %v797, %v799
    %v801 = vrot.slane %v787, %v800
    %v802 = vcombine.high %v794, %v794
    %v803 = vcombine.high %v801, %v801
    %v804 = vcombine.high %v782, %v782
    %v806 = vunpack.c.l.s4 1983009808
    %v807 = vunpack.c.0.s8 %v806
    %v808 = vlaneseq
    %v809 = vshrl.u32 %v808, 7
    %v810 = vsub.s32 %v807, %v809
    %v811 = vrot.slane %v782, %v810
    %v813 = vunpack.c.l.s4 1983009808
    %v814 = vunpack.c.0.s8 %v813
    %v815 = vlaneseq
    %v816 = vshrl.u32 %v815, 7
    %v817 = vsub.s32 %v814, %v816
    %v818 = vrot.slane %v804, %v817
    %v819 = vcombine.high %v811, %v811
    %v820 = vcombine.high %v818, %v818
    %vm829 = vcmask 517120
    %830 = vst.msk [vmem:[%s9] sm:$0x3] %vm829, %v794
    %831 = vst.msk [vmem:[%s9 + $0x2] sm:$0x3] %vm829, %v802
    %832 = vst.msk [vmem:[%s9 + $0x4] sm:$0x3] %vm829, %v801
    %833 = vst.msk [vmem:[%s9 + $0x6] sm:$0x3] %vm829, %v803
    %834 = vst.msk [vmem:[%s9 + $0x8] sm:$0x3] %vm829, %v811
    %835 = vst.msk [vmem:[%s9 + $0xa] sm:$0x3] %vm829, %v819
    %836 = vst.msk [vmem:[%s9 + $0xc] sm:$0x3] %vm829, %v818
    %837 = vst.msk [vmem:[%s9 + $0xe] sm:$0x3] %vm829, %v820
    // Predicated region
    $region57: #{bidirectional_lstm.1} parent=1 // pred_check
      _
    $region58: #{bidirectional_lstm.1} parent=1 // pred_check_branch
      %839 = sbr.rel (0) target = $region60
    $region59: #{bidirectional_lstm.1} parent=1 // pred_region
      _
    $region60: #{bidirectional_lstm.1} parent=1 // pred_fallthru
      _
    // Predicated region
    $region61: #{bidirectional_lstm.1} parent=1 // pred_check
      _
    $region62: #{bidirectional_lstm.1} parent=1 // pred_check_branch
      %841 = sbr.rel (0) target = $region64
    $region63: #{bidirectional_lstm.1} parent=1 // pred_region
      _
    $region64: #{bidirectional_lstm.1} parent=1 // pred_fallthru
      _
    %842 = vsyncpa [#allocation6], 1
    %843 = vsyncpa [#allocation8], 1

</llo_original>
